<compile_context>
chip_gen: v7x
topology: tpu7x:2x2x1
jax: 0.10.0
libtpu: 0.0.40
codegen_flags: <defaults>
</compile_context>

<pallas_src>
import functools
import math

import jax
import jax.numpy as jnp
from jax import lax
from jax.experimental import pallas as pl
from jax.experimental.pallas import tpu as pltpu


def _xlogx(v):
    return float(v) * math.log(v) if v > 0.0 else 0.0


def _round_up(x, m):
    return ((x + m - 1) // m) * m


def _kl_div_kernel(target_ref, pred_ref, out_ref, *, pad_index, alpha, smooth,
                   c_entropy):
    pred = pred_ref[...].astype(jnp.float32)        # (tile_n, V) log-probs
    tgt = target_ref[...]                           # (tile_n, 1) int32
    tn, V = pred.shape

    cols = lax.broadcasted_iota(jnp.int32, (tn, V), 1)
    # One lane-reduction for the row sum, one compare+select+reduce for
    # pred[row, tgt], plus a static single-lane slice for pred[row, pad].
    rowsum = jnp.sum(pred, axis=-1, keepdims=True)                    # (tn, 1)
    pred_tgt = jnp.sum(jnp.where(cols == tgt, pred, 0.0),
                       axis=-1, keepdims=True)                        # (tn, 1)
    pred_pad = pred[:, pad_index:pad_index + 1]                       # (tn, 1)

    cross = smooth * rowsum + (1.0 - alpha) * pred_tgt - smooth * pred_pad
    # Rows whose target is the pad token contribute exactly 0 (this also masks
    # the out-of-bounds rows of a ragged final tile, whose padded targets are
    # pad_index -- jnp.where selects, so garbage/NaN in `cross` never leaks).
    row_loss = jnp.where(tgt == pad_index, 0.0, c_entropy - cross)
    out_ref[...] = row_loss


def sequence_generation_loss(prediction, target, *, vocab_size, pad_index,
                             alpha, tile_n=None):
    """prediction: [B, S-1, V] log-probabilities; target: [B, S-1] int ids."""
    V = prediction.shape[-1]
    pred2d = prediction.reshape(-1, V)
    tgt1d = target.reshape(-1).astype(jnp.int32)
    N = pred2d.shape[0]

    itemsize = jnp.dtype(pred2d.dtype).itemsize
    if tile_n is None:
        # Size the row tile from V against a conservative VMEM budget that is
        # safe on v5e/v6e (128 MiB) and v7x (64 MiB physical):
        #   2 x tile_n*V*itemsize  double-buffered prediction tile
        #   1 x tile_n*V*4         f32 working values / temporaries
        #   ~2 KiB per row         lane-padded (tile_n,1) target/output buffers
        budget = 30 * 1024 * 1024
        per_row = V * (2 * itemsize + 4) + 2048
        tile_n = (budget // per_row) // 8 * 8
        tile_n = max(8, min(1024, tile_n))
    tile_n = max(8, min(int(tile_n), _round_up(N, 8)))
    assert tile_n % 8 == 0, "tile_n must be a multiple of 8 (sublane quantum)"

    num_tiles = pl.cdiv(N, tile_n)
    n_pad = num_tiles * tile_n

    # Pad the (cheap) target vector with pad_index so the partially
    # out-of-bounds rows of the final prediction tile are masked to zero loss.
    tgt2d = jnp.pad(tgt1d, (0, n_pad - N),
                    constant_values=pad_index).reshape(n_pad, 1)

    # Label-smoothing constants hoisted to compile time (no in-kernel logs).
    smooth = alpha / (vocab_size - 2)
    c_entropy = (V - 2) * _xlogx(smooth) + _xlogx(1.0 - alpha + smooth)

    kernel = functools.partial(
        _kl_div_kernel, pad_index=int(pad_index), alpha=float(alpha),
        smooth=float(smooth), c_entropy=float(c_entropy))

    row_losses = pl.pallas_call(
        kernel,
        out_shape=jax.ShapeDtypeStruct((n_pad, 1), jnp.float32),
        grid_spec=pltpu.PrefetchScalarGridSpec(
            num_scalar_prefetch=0,
            grid=(num_tiles,),
            in_specs=[
                pl.BlockSpec((tile_n, 1), lambda i: (i, 0)),   # target ids
                pl.BlockSpec((tile_n, V), lambda i: (i, 0)),   # log-prob rows
            ],
            out_specs=pl.BlockSpec((tile_n, 1), lambda i: (i, 0)),
        ),
        compiler_params=pltpu.CompilerParams(
            dimension_semantics=("parallel",),
            vmem_limit_bytes=48 * 1024 * 1024,
        ),
    )(tgt2d, pred2d)
    return jnp.sum(row_losses)


def _reference_loss(prediction, target, *, vocab_size, pad_index, alpha):
    V = prediction.shape[-1]
    pred = prediction.reshape(-1, V).astype(jnp.float32)
    tgt = target.reshape(-1)
    y = jax.nn.one_hot(tgt, V, dtype=jnp.float32) * (1.0 - alpha) \
        + alpha / (vocab_size - 2)
    y = y.at[:, pad_index].set(0.0)
    y = jnp.where((tgt == pad_index)[:, None], 0.0, y)
    term = jnp.where(y > 0, y * (jnp.log(jnp.where(y > 0, y, 1.0)) - pred), 0.0)
    return jnp.sum(term)


if __name__ == "__main__":
    key = jax.random.PRNGKey(0)
    batch, seqlen, vocab_size = 4, 17, 128    # prediction over seqlen-1 positions
    pad_index, alpha = 0, 0.1

    k_logits, k_tgt = jax.random.split(key)
    logits = jax.random.normal(k_logits, (batch, seqlen - 1, vocab_size),
                               jnp.float32)
    prediction = jax.nn.log_softmax(logits, axis=-1)   # kl_div expects log-probs
    target = jax.random.randint(k_tgt, (batch, seqlen - 1), 0, vocab_size,
                                jnp.int32)
    # sprinkle some pad tokens
    target = target.at[0, -2:].set(pad_index)
    target = target.at[1, -3:].set(pad_index)
    target = target.at[3, -5:].set(pad_index)

    ref = _reference_loss(prediction, target, vocab_size=vocab_size,
                          pad_index=pad_index, alpha=alpha)

    # tile_n=24 forces multiple grid steps plus a ragged final tile
    # (N=64, n_pad=72), exercising the remainder-masking path.
    loss = sequence_generation_loss(prediction, target, vocab_size=vocab_size,
                                    pad_index=pad_index, alpha=alpha, tile_n=24)
    loss = jax.block_until_ready(loss)
    assert jnp.allclose(loss, ref, rtol=1e-4, atol=1e-4), (loss, ref)

    # auto-sized (VMEM-budgeted, single-tile here) path
    loss2 = jax.block_until_ready(sequence_generation_loss(
        prediction, target, vocab_size=vocab_size, pad_index=pad_index,
        alpha=alpha))
    assert jnp.allclose(loss2, ref, rtol=1e-4, atol=1e-4), (loss2, ref)

    print("KERNEL_OK")
</pallas_src>

<mosaic_0001>
module attributes {stable_mosaic.version = 11 : i64} {
  func.func @_kl_div_kernel(%arg0: i32, %arg1: memref<24x1xi32, #tpu.memory_space<vmem>>, %arg2: memref<24x128xf32, #tpu.memory_space<vmem>>, %arg3: memref<24x1xf32, #tpu.memory_space<vmem>>) attributes {dimension_semantics = [#tpu.dimension_semantics<parallel>], iteration_bounds = array<i64: 3>, scalar_prefetch = 0 : i64, scratch_operands = 0 : i64, tpu.core_type = #tpu.core_type<tc>, window_params = [{transform_indices = @transform_0, window_bounds = array<i64: 24, 1>}, {transform_indices = @transform_1, window_bounds = array<i64: 24, 128>}, {transform_indices = @transform_2, window_bounds = array<i64: 24, 1>}]} {
    %c0 = arith.constant 0 : index
    %c0_0 = arith.constant 0 : index
    %0 = vector.load %arg2[%c0, %c0_0] : memref<24x128xf32, #tpu.memory_space<vmem>>, vector<24x128xf32>
    %c0_1 = arith.constant 0 : index
    %c0_2 = arith.constant 0 : index
    %1 = vector.load %arg1[%c0_1, %c0_2] : memref<24x1xi32, #tpu.memory_space<vmem>>, vector<24x1xi32>
    %2 = tpu.iota {dimensions = array<i32: 1>} : vector<24x128xi32>
    %cst = arith.constant dense<0.000000e+00> : vector<24xf32>
    %3 = vector.multi_reduction <add>, %0, %cst [1] : vector<24x128xf32> to vector<24xf32>
    %4 = vector.shape_cast %3 : vector<24xf32> to vector<24x1xf32>
    %5 = vector.broadcast %1 : vector<24x1xi32> to vector<24x128xi32>
    %6 = arith.cmpi eq, %2, %5 : vector<24x128xi32>
    %cst_3 = arith.constant 0.000000e+00 : f32
    %7 = vector.broadcast %cst_3 : f32 to vector<24x128xf32>
    %8 = arith.select %6, %0, %7 : vector<24x128xi1>, vector<24x128xf32>
    %cst_4 = arith.constant dense<0.000000e+00> : vector<24xf32>
    %9 = vector.multi_reduction <add>, %8, %cst_4 [1] : vector<24x128xf32> to vector<24xf32>
    %10 = vector.shape_cast %9 : vector<24xf32> to vector<24x1xf32>
    %11 = vector.extract_strided_slice %0 {offsets = [0, 0], sizes = [24, 1], strides = [1, 1]} : vector<24x128xf32> to vector<24x1xf32>
    %cst_5 = arith.constant 7.93650805E-4 : f32
    %12 = vector.broadcast %cst_5 : f32 to vector<24x1xf32>
    %13 = arith.mulf %12, %4 : vector<24x1xf32>
    %cst_6 = arith.constant 0.899999976 : f32
    %14 = vector.broadcast %cst_6 : f32 to vector<24x1xf32>
    %15 = arith.mulf %14, %10 : vector<24x1xf32>
    %16 = arith.addf %13, %15 : vector<24x1xf32>
    %cst_7 = arith.constant 7.93650805E-4 : f32
    %17 = vector.broadcast %cst_7 : f32 to vector<24x1xf32>
    %18 = arith.mulf %17, %11 : vector<24x1xf32>
    %19 = arith.subf %16, %18 : vector<24x1xf32>
    %c0_i32 = arith.constant 0 : i32
    %20 = vector.broadcast %c0_i32 : i32 to vector<24x1xi32>
    %21 = arith.cmpi eq, %1, %20 : vector<24x1xi32>
    %cst_8 = arith.constant -0.808000803 : f32
    %22 = vector.broadcast %cst_8 : f32 to vector<24x1xf32>
    %23 = arith.subf %22, %19 : vector<24x1xf32>
    %cst_9 = arith.constant 0.000000e+00 : f32
    %24 = vector.broadcast %cst_9 : f32 to vector<24x1xf32>
    %25 = arith.select %21, %24, %23 : vector<24x1xi1>, vector<24x1xf32>
    %c0_10 = arith.constant 0 : index
    %c0_11 = arith.constant 0 : index
    %26 = vector.load %arg3[%c0_10, %c0_11] : memref<24x1xf32, #tpu.memory_space<vmem>>, vector<24x1xf32>
    tpu.vector_store %arg3[%c0_10, %c0_11], %25 {strides = array<i32>} : memref<24x1xf32, #tpu.memory_space<vmem>>, vector<24x1xf32>,
    return
  }
  func.func @transform_0(%arg0: i32) -> (i32, i32) {
    %c0_i32 = arith.constant 0 : i32
    %c0_i32_0 = arith.constant 0 : i32
    return %arg0, %c0_i32 : i32, i32
  }
  func.func @transform_1(%arg0: i32) -> (i32, i32) {
    %c0_i32 = arith.constant 0 : i32
    %c0_i32_0 = arith.constant 0 : i32
    return %arg0, %c0_i32 : i32, i32
  }
  func.func @transform_2(%arg0: i32) -> (i32, i32) {
    %c0_i32 = arith.constant 0 : i32
    %c0_i32_0 = arith.constant 0 : i32
    return %arg0, %c0_i32 : i32, i32
  }
}

</mosaic_0001>

<llo_original>
// kernel: tpu_custom_call.1
$region0: #{tpu_custom_call.1}
  #allocation0 [shape = 'u32[]', space=smem, size = 0x4, offset = 0x4, fixed_abs, tag = 'smem constant byte address 0x4 - core index']
  #allocation1 [shape = 'u32[144,128]{1,0:T(1,128)}', space=vmem, size = 0x12000, scoped, tag = 'internal scratch']
  %s0 = inlined_call_operand.vmem [shape: s32[72,1], index: 0, kind: input, shape index: {}]
  %s1 = inlined_call_operand.vmem [shape: f32[64,128], index: 1, kind: input, shape index: {}]
  %s2 = inlined_call_operand.vmem [shape: f32[72,1], index: 2, kind: output, shape index: {}]
  %s3 = sld [smem:[#allocation0]]
  $region41: #{tpu_custom_call.1} parent=0
    _
  %s5 = ssub.s32 1, %s3
  %s6 = scalar_select 0, %s5, %s3
  loop: start=0, step=1, limit=5
  $region2: #{tpu_custom_call.1} parent=0 // loop_pre_header
    _
  $region3: #{tpu_custom_call.1} parent=0 // loop_header
    %s8 = sphi 0, %s12
    %p9 = scmp.ge.s32.totalorder %s8, 5
    %s18 = sphi 0, %s20
    %s21 = sphi 0, %s18
    %s22 = sphi 0, %s21
    %s38 = sphi 0, %s22
    %s44 = sphi 0, %s46
    %s47 = sphi 0, %s44
    %s48 = sphi 0, %s47
    %s64 = sphi 0, %s48
    %s70 = sphi 0, %s72
    %s73 = sphi 0, %s70
    %s74 = sphi 0, %s73
    %s90 = sphi 0, %s74
  $region4: #{tpu_custom_call.1} parent=0 // loop_header_branch
    %11 = sbr.rel (%p9) target = $region8
  $region5: #{tpu_custom_call.1} parent=0 // loop_body
    %s13 = ssub.s32 %s8, 1
    %s14 = ssub.s32 %s8, 2
    %s15 = sadd.s32 %s8, 1
    %s16 = ssub.s32 %s8, %s15
    %p17 = scmp.eq.s32.totalorder %s16, 0
    %s19 = sadd.s32 %s18, 1
    %s20 = scalar_select %p17, %s18, %s19
    %p23 = pneg %p17
    %p24 = scmp.eq.s32.totalorder %s8, 2
    %p25 = por %p23, %p24
    %p26 = scmp.ne.s32.totalorder %s18, %s21
    %p27 = scmp.eq.s32.totalorder %s8, 0
    %p28 = por %p26, %p27
    %p29 = scmp.ne.s32.totalorder %s18, %s21
    %p30 = scmp.eq.s32.totalorder %s13, 2
    %p31 = por %p29, %p30
    %p32 = scmp.ne.s32.totalorder %s21, %s22
    %p33 = scmp.eq.s32.totalorder %s13, 0
    %p34 = por %p32, %p33
    %p35 = scmp.ne.s32.totalorder %s21, %s22
    %p36 = scmp.eq.s32.totalorder %s14, 2
    %p37 = por %p35, %p36
    %p39 = scmp.ne.s32.totalorder %s22, %s38
    %p40 = scmp.eq.s32.totalorder %s14, 0
    %p41 = por %p39, %p40
    %s42 = ssub.s32 %s8, %s15
    %p43 = scmp.eq.s32.totalorder %s42, 0
    %s45 = sadd.s32 %s44, 1
    %s46 = scalar_select %p43, %s44, %s45
    %p49 = pneg %p43
    %p50 = scmp.eq.s32.totalorder %s8, 2
    %p51 = por %p49, %p50
    %p52 = scmp.ne.s32.totalorder %s44, %s47
    %p53 = scmp.eq.s32.totalorder %s8, 0
    %p54 = por %p52, %p53
    %p55 = scmp.ne.s32.totalorder %s44, %s47
    %p56 = scmp.eq.s32.totalorder %s13, 2
    %p57 = por %p55, %p56
    %p58 = scmp.ne.s32.totalorder %s47, %s48
    %p59 = scmp.eq.s32.totalorder %s13, 0
    %p60 = por %p58, %p59
    %p61 = scmp.ne.s32.totalorder %s47, %s48
    %p62 = scmp.eq.s32.totalorder %s14, 2
    %p63 = por %p61, %p62
    %p65 = scmp.ne.s32.totalorder %s48, %s64
    %p66 = scmp.eq.s32.totalorder %s14, 0
    %p67 = por %p65, %p66
    %s68 = ssub.s32 %s8, %s15
    %p69 = scmp.eq.s32.totalorder %s68, 0
    %s71 = sadd.s32 %s70, 1
    %s72 = scalar_select %p69, %s70, %s71
    %p75 = pneg %p69
    %p76 = scmp.eq.s32.totalorder %s8, 2
    %p77 = por %p75, %p76
    %p78 = scmp.ne.s32.totalorder %s70, %s73
    %p79 = scmp.eq.s32.totalorder %s8, 0
    %p80 = por %p78, %p79
    %p81 = scmp.ne.s32.totalorder %s70, %s73
    %p82 = scmp.eq.s32.totalorder %s13, 2
    %p83 = por %p81, %p82
    %p84 = scmp.ne.s32.totalorder %s73, %s74
    %p85 = scmp.eq.s32.totalorder %s13, 0
    %p86 = por %p84, %p85
    %p87 = scmp.ne.s32.totalorder %s73, %s74
    %p88 = scmp.eq.s32.totalorder %s14, 2
    %p89 = por %p87, %p88
    %p91 = scmp.ne.s32.totalorder %s74, %s90
    %p92 = scmp.eq.s32.totalorder %s14, 0
    %p93 = por %p91, %p92
    %p94 = scmp.le.s32.totalorder 1, %s8
    %p95 = scmp.lt.s32.totalorder %s8, 4
    %p96 = pnand %p94, %p95
    %p97 = pneg %p96
    // Predicated region
    $region9: #{tpu_custom_call.1} parent=5 // pred_check
      _
    $region10: #{tpu_custom_call.1} parent=5 // pred_check_branch
      %99 = sbr.rel (%p96) target = $region12
    $region11: #{tpu_custom_call.1} parent=5 // pred_region
      %s100 = ssub.s32 %s8, 1
    $region12: #{tpu_custom_call.1} parent=5 // pred_fallthru
      _
    %p101 = scmp.lt.s32.totalorder %s8, 3
    // Predicated region
    $region13: #{tpu_custom_call.1} parent=5 // pred_check
      %p102 = pneg %p101
    $region14: #{tpu_custom_call.1} parent=5 // pred_check_branch
      %104 = sbr.rel (%p102) target = $region16
    $region15: #{tpu_custom_call.1} parent=5 // pred_region
      // Predicated region
      $region17: #{tpu_custom_call.1} parent=15 // pred_check
        %p105 = pneg %p28
      $region18: #{tpu_custom_call.1} parent=15 // pred_check_branch
        %107 = sbr.rel (%p105) target = $region20
      $region19: #{tpu_custom_call.1} parent=15 // pred_region
        %s108 = smul.u32 3, %s8
        %p109 = scmp.lt.s32.totalorder %s108, 8
        %s110 = scalar_select %p109, %s108, 8
        %s111 = smul.addr %s110, 8
        %s112 = scalar_lea.vmem %s0, %s111
        %s113 = smul.u32 3, %s8
      $region20: #{tpu_custom_call.1} parent=15 // pred_fallthru
        _
      // Predicated region
      $region21: #{tpu_custom_call.1} parent=15 // pred_check
        %p114 = pneg %p54
      $region22: #{tpu_custom_call.1} parent=15 // pred_check_branch
        %116 = sbr.rel (%p114) target = $region24
      $region23: #{tpu_custom_call.1} parent=15 // pred_region
        %s117 = smul.u32 3, %s8
        %s118 = ssub.s32 8, %s117
        %p119 = scmp.lt.s32.totalorder %s118, 3
        %s120 = scalar_select %p119, %s118, 3
        %s121 = smul.u32 128, %s120
        %p122 = scmp.lt.s32.totalorder %s117, 7
        %s123 = scalar_select %p122, %s117, 7
        %s124 = smul.addr %s123, 8
        %s125 = scalar_lea.vmem %s1, %s124
        %s126 = smul.u32 3, %s8
        %s127 = ssub.s32 8, %s126
        %p128 = scmp.lt.s32.totalorder %s127, 3
        %s129 = scalar_select %p128, %s127, 3
        %s130 = smul.u32 128, %s129
      $region24: #{tpu_custom_call.1} parent=15 // pred_fallthru
        _
    $region16: #{tpu_custom_call.1} parent=5 // pred_fallthru
      _
    %p131 = scmp.le.s32.totalorder 1, %s8
    %p132 = scmp.lt.s32.totalorder %s8, 4
    %p133 = pnand %p131, %p132
    %p134 = pneg %p133
    // Predicated region
    $region25: #{tpu_custom_call.1} parent=5 // pred_check
      _
    $region26: #{tpu_custom_call.1} parent=5 // pred_check_branch
      %136 = sbr.rel (%p133) target = $region28
    $region27: #{tpu_custom_call.1} parent=5 // pred_region
      %s137 = ssub.s32 %s8, 1
      %s138 = smul.u32 3, %s13
      %p139 = scmp.lt.s32.totalorder %s138, 8
      %s140 = scalar_select %p139, %s138, 8
      %s141 = smul.addr %s140, 8
      %s142 = scalar_lea.vmem %s0, %s141
      %p143 = pneg %p34
      %p144 = pneg %p31
      %s145 = smul.u32 3, %s13
      %s146 = ssub.s32 8, %s145
      %p147 = scmp.lt.s32.totalorder %s146, 3
      %s148 = scalar_select %p147, %s146, 3
      %s149 = smul.u32 128, %s148
      %p150 = scmp.lt.s32.totalorder %s145, 7
      %s151 = scalar_select %p150, %s145, 7
      %s152 = smul.addr %s151, 8
      %s153 = scalar_lea.vmem %s1, %s152
      %p154 = pneg %p60
      %p155 = pneg %p57
      %p156 = pneg %p86
      %p157 = pneg %p83
      %s158 = smul.u32 3, %s13
      %p159 = scmp.lt.s32.totalorder %s158, 8
      %s160 = scalar_select %p159, %s158, 8
      %s161 = smul.addr %s160, 8
      %s162 = scalar_lea.vmem %s2, %s161
      %s163 = smul.u32 3, %s13
      %p164 = scmp.lt.s32.totalorder %s163, 8
      %s165 = scalar_select %p164, %s163, 8
      %s166 = smul.addr %s165, 8
      %s167 = scalar_lea.vmem %s0, %s166
      %s168 = smul.u32 3, %s13
      %s169 = smul.u32 3, %s13
      %s170 = ssub.s32 8, %s169
      %p171 = scmp.lt.s32.totalorder %s170, 3
      %s172 = scalar_select %p171, %s170, 3
      %s173 = smul.u32 128, %s172
      %p174 = scmp.lt.s32.totalorder %s169, 7
      %s175 = scalar_select %p174, %s169, 7
      %s176 = smul.addr %s175, 8
      %s177 = scalar_lea.vmem %s1, %s176
      %s178 = smul.u32 3, %s13
      %s179 = ssub.s32 8, %s178
      %p180 = scmp.lt.s32.totalorder %s179, 3
      %s181 = scalar_select %p180, %s179, 3
      %s182 = smul.u32 128, %s181
      %s183 = smul.u32 3, %s13
      %p184 = scmp.lt.s32.totalorder %s183, 8
      %s185 = scalar_select %p184, %s183, 8
      %s186 = smul.addr %s185, 8
      %s187 = scalar_lea.vmem %s2, %s186
      %s188 = smul.u32 3, %s13
      %v189 = vld [vmem:[%s177] sm:$0xff]
      %v190 = vld [vmem:[%s177 + $0x8] sm:$0xff]
      %v191 = vld [vmem:[%s177 + $0x10] sm:$0xff]
      %v192 = vld [vmem:[%s167] sm:$0xff]
      %v193 = vld [vmem:[%s167 + $0x8] sm:$0xff]
      %v194 = vld [vmem:[%s167 + $0x10] sm:$0xff]
      %v195 = vlaneseq
      %v196 = vand.u32 %v195, 127
      %197 = vadd.xlane.f32.xlu0 %v189
      %v198 = vpop.xlane.xlu0 %197
      %199 = vadd.xlane.f32.xlu0 %v190
      %v200 = vpop.xlane.xlu0 %199
      %201 = vadd.xlane.f32.xlu0 %v191
      %v202 = vpop.xlane.xlu0 %201
      %203 = vset.pattern.permute.xlu0 0
      %204 = vperm.xlu0 %203, %v192
      %v205 = vpop.permute.xlu0 %204
      %206 = vset.pattern.permute.xlu0 0
      %207 = vperm.xlu0 %206, %v193
      %v208 = vpop.permute.xlu0 %207
      %209 = vset.pattern.permute.xlu0 0
      %210 = vperm.xlu0 %209, %v194
      %v211 = vpop.permute.xlu0 %210
      %vm212 = vcmp.eq.s32.totalorder %v196, %v205
      %vm213 = vcmp.eq.s32.totalorder %v196, %v208
      %vm214 = vcmp.eq.s32.totalorder %v196, %v211
      %v215 = vsel %vm212, %v189, 0.0
      %v216 = vsel %vm213, %v190, 0.0
      %v217 = vsel %vm214, %v191, 0.0
      %218 = vadd.xlane.f32.xlu0 %v215
      %v219 = vpop.xlane.xlu0 %218
      %220 = vadd.xlane.f32.xlu0 %v216
      %v221 = vpop.xlane.xlu0 %220
      %222 = vadd.xlane.f32.xlu0 %v217
      %v223 = vpop.xlane.xlu0 %222
      %v224 = vmul.f32 %v198, 0.0007936508
      %v225 = vmul.f32 %v200, 0.0007936508
      %v226 = vmul.f32 %v202, 0.0007936508
      %v227 = vmul.f32 %v219, 0.9
      %v228 = vmul.f32 %v221, 0.9
      %v229 = vmul.f32 %v223, 0.9
      %v230 = vadd.f32 %v224, %v227
      %v231 = vadd.f32 %v225, %v228
      %v232 = vadd.f32 %v226, %v229
      %v233 = vmul.f32 %v189, 0.0007936508
      %v234 = vmul.f32 %v190, 0.0007936508
      %v235 = vmul.f32 %v191, 0.0007936508
      %v236 = vsub.f32 %v230, %v233
      %v237 = vsub.f32 %v231, %v234
      %v238 = vsub.f32 %v232, %v235
      %vm239 = vcmp.eq.s32.totalorder %v192, 0
      %vm240 = vcmp.eq.s32.totalorder %v193, 0
      %vm241 = vcmp.eq.s32.totalorder %v194, 0
      %v242 = vsub.f32 -0.8080008, %v236
      %v243 = vsub.f32 -0.8080008, %v237
      %v244 = vsub.f32 -0.8080008, %v238
      %v245 = vsel %vm239, 0.0, %v242
      %v246 = vsel %vm240, 0.0, %v243
      %v247 = vsel %vm241, 0.0, %v244
      %vm248 = vcmask 7168
      %249 = vst.msk [vmem:[%s187] sm:$0xff] %vm248, %v245
      %250 = vst.msk [vmem:[%s187 + $0x8] sm:$0xff] %vm248, %v246
      %251 = vst.msk [vmem:[%s187 + $0x10] sm:$0xff] %vm248, %v247
      %s252 = smul.u32 3, %s13
      %p253 = scmp.lt.s32.totalorder %s252, 8
      %s254 = scalar_select %p253, %s252, 8
      %s255 = smul.addr %s254, 8
      %s256 = scalar_lea.vmem %s2, %s255
      // Predicated region
      $region29: #{tpu_custom_call.1} parent=27 // pred_check
        %p257 = pneg %p83
      $region30: #{tpu_custom_call.1} parent=27 // pred_check_branch
        %259 = sbr.rel (%p257) target = $region32
      $region31: #{tpu_custom_call.1} parent=27 // pred_region
        %s260 = smul.u32 3, %s13
      $region32: #{tpu_custom_call.1} parent=27 // pred_fallthru
        _
    $region28: #{tpu_custom_call.1} parent=5 // pred_fallthru
      _
    %p261 = scmp.le.s32.totalorder 2, %s8
    // Predicated region
    $region33: #{tpu_custom_call.1} parent=5 // pred_check
      %p262 = pneg %p261
    $region34: #{tpu_custom_call.1} parent=5 // pred_check_branch
      %264 = sbr.rel (%p262) target = $region36
    $region35: #{tpu_custom_call.1} parent=5 // pred_region
      %s265 = ssub.s32 %s8, 2
      // Predicated region
      $region37: #{tpu_custom_call.1} parent=35 // pred_check
        %p266 = pneg %p89
      $region38: #{tpu_custom_call.1} parent=35 // pred_check_branch
        %268 = sbr.rel (%p266) target = $region40
      $region39: #{tpu_custom_call.1} parent=35 // pred_region
        %s269 = smul.u32 3, %s14
        %p270 = scmp.lt.s32.totalorder %s269, 8
        %s271 = scalar_select %p270, %s269, 8
        %s272 = smul.addr %s271, 8
        %s273 = scalar_lea.vmem %s2, %s272
      $region40: #{tpu_custom_call.1} parent=35 // pred_fallthru
        _
    $region36: #{tpu_custom_call.1} parent=5 // pred_fallthru
      _
  $region6: #{tpu_custom_call.1} parent=0 // loop_footer
    %s12 = sadd.s32 1, %s8
  $region7: #{tpu_custom_call.1} parent=0 // loop_footer_branch
    %7 = sbr.rel target = $region3
  $region8: #{tpu_custom_call.1} parent=0 // loop_exit
    _

</llo_original>
